<compile_context>
chip_gen: v6e
topology: v6e:2x2x1
jax: 0.10.0
libtpu: 0.0.40
codegen_flags: <defaults>
</compile_context>

<pallas_src>
import functools

import jax
import jax.numpy as jnp
from jax import lax
from jax.experimental import pallas as pl
from jax.experimental.pallas import tpu as pltpu


# ---------------------------------------------------------------------------
# Kernels
# ---------------------------------------------------------------------------

def _conv_norm_kernel(p_ref, w_ref, prm_ref, y_ref, ss_ref, sum_acc, sq_acc,
                      *, relu, inv_hw, fused):
    """Pass 1 (normalize=True): conv strip + instance-norm statistics.

    p_ref:   (ckk, S)         compute_dtype patches strip
    w_ref:   (c_out, ckk)     compute_dtype flattened weights
    prm_ref: (3, c_out, 1)    f32 [bias(unused), gamma, beta]
    y_ref:   (c_out, S)       raw conv output strip (or final output if fused)
    ss_ref:  (2, c_out, 1)    f32 [scale, shift] written at the last strip
    sum_acc/sq_acc: (c_out,1) f32 VMEM scratch, accumulated across strips.
    """
    s = pl.program_id(1)
    # Single big-contraction MXU matmul, f32 accumulation.
    y = jnp.dot(w_ref[...], p_ref[...], preferred_element_type=jnp.float32)

    if fused:
        # Whole feature map in one strip: statistics are complete right now,
        # normalize + affine + ReLU in place (single pass, no re-read).
        mean = jnp.sum(y, axis=1, keepdims=True) * inv_hw
        ex2 = jnp.sum(y * y, axis=1, keepdims=True) * inv_hw
        var = ex2 - mean * mean                      # f32 sums -> OK (review note)
        scale = prm_ref[1] * lax.rsqrt(var + 1e-5)   # rsqrt -> EUP slot
        shift = prm_ref[2] - mean * scale
        out = y * scale + shift
        if relu:
            out = jnp.maximum(out, 0.0)
        y_ref[...] = out.astype(y_ref.dtype)
        ss_ref[0] = scale
        ss_ref[1] = shift
    else:
        # Multi-strip: accumulate full-sample statistics (never per-strip!),
        # store the raw conv strip, emit scale/shift at the last strip.
        @pl.when(s == 0)
        def _():
            sum_acc[...] = jnp.zeros_like(sum_acc)
            sq_acc[...] = jnp.zeros_like(sq_acc)

        sum_acc[...] += jnp.sum(y, axis=1, keepdims=True)
        sq_acc[...] += jnp.sum(y * y, axis=1, keepdims=True)
        y_ref[...] = y.astype(y_ref.dtype)

        @pl.when(s == pl.num_programs(1) - 1)
        def _():
            mean = sum_acc[...] * inv_hw
            var = sq_acc[...] * inv_hw - mean * mean
            scale = prm_ref[1] * lax.rsqrt(var + 1e-5)
            shift = prm_ref[2] - mean * scale
            ss_ref[0] = scale
            ss_ref[1] = shift


def _apply_norm_kernel(y_ref, ss_ref, o_ref, *, relu):
    """Pass 2 (normalize=True, multi-strip): y*scale + shift (+ReLU).

    Strip axis is fully parallel (megacore-shardable); output aliases input.
    """
    y = y_ref[...].astype(jnp.float32)
    out = y * ss_ref[0] + ss_ref[1]
    if relu:
        out = jnp.maximum(out, 0.0)
    o_ref[...] = out.astype(o_ref.dtype)


def _conv_bias_kernel(p_ref, w_ref, prm_ref, o_ref, *, relu):
    """normalize=False path: conv strip + bias (+ReLU). Fully parallel grid."""
    y = jnp.dot(w_ref[...], p_ref[...], preferred_element_type=jnp.float32)
    y = y + prm_ref[0]
    if relu:
        y = jnp.maximum(y, 0.0)
    o_ref[...] = y.astype(o_ref.dtype)


# ---------------------------------------------------------------------------
# Wrapper helpers
# ---------------------------------------------------------------------------

def _cdiv(a, b):
    return -(-a // b)


def _vmem_capacity_bytes():
    """Physical per-core VMEM (128 MiB v5e/v6e, 64 MiB v7x); safe fallback."""
    try:
        cap = int(pltpu.get_tpu_info().vmem_capacity_bytes)
        if cap > 0:
            return cap
    except Exception:
        pass
    return 64 * 1024 * 1024  # conservative: assume v7x


def _choose_strip_and_vmem(hw, ckk, c_out, cd, od, max_hw_strip):
    """Pick hw-strip size + vmem limit from the actual VMEM footprint.

    Footprint model (per review): triple-buffered patches strip, double-
    buffered weights and output strip, ~3 full-size f32 temporaries for the
    norm path (y, y*y, scaled result), plus small params / accumulators.
    """
    phys = _vmem_capacity_bytes()
    cap = max(int(phys * 0.80), 24 * 1024 * 1024)   # ~51 MiB v7x, ~102 MiB v5e/v6e

    per_lane = 3 * ckk * cd + 2 * c_out * od + 3 * c_out * 4
    fixed = 2 * c_out * ckk * cd + 256 * 1024
    s = max((cap - fixed) // per_lane, 128)

    hw_al = _cdiv(hw, 128) * 128
    s = min(s, hw_al)
    if max_hw_strip is not None:
        s = min(s, max_hw_strip)
    if s >= 256:
        s = (s // 256) * 256      # fill the 256-wide MXU result dim (v6e/v7x)
    else:
        s = max(128, (s // 128) * 128)

    num_strips = _cdiv(hw, s)
    hw_pad = num_strips * s

    need = (3 * ckk * s * cd + 2 * c_out * ckk * cd
            + 2 * c_out * s * od + 3 * c_out * s * 4 + 512 * 1024)
    vmem_limit = int(max(min(cap, need + need // 2), 32 * 1024 * 1024))
    return s, num_strips, hw_pad, vmem_limit


def _im2col(xpad, ksize, stride, h_out, w_out):
    """(N, C, H_pad, W_pad) -> (N, C*K*K, H_out*W_out), contraction order (c,kh,kw)."""
    n, c, _, _ = xpad.shape
    hw = h_out * w_out
    cols = []
    for kh in range(ksize):
        for kw in range(ksize):
            sl = lax.slice(
                xpad,
                (0, 0, kh, kw),
                (n, c,
                 kh + (h_out - 1) * stride + 1,
                 kw + (w_out - 1) * stride + 1),
                (1, 1, stride, stride))                  # (N, C, H_out, W_out)
            cols.append(sl.reshape(n, c, 1, hw))
    patches = jnp.concatenate(cols, axis=2)              # (N, C, K*K, HW)
    return patches.reshape(n, c * ksize * ksize, hw)


# ---------------------------------------------------------------------------
# Public entry point
# ---------------------------------------------------------------------------

def conv_block(x, w, b, gamma=None, beta=None, *, kernel_size, stride=1,
               upsample=False, normalize=True, relu=True,
               compute_dtype=jnp.bfloat16, max_hw_strip=None):
    """Forward pass of ConvBlock.  x: (N, C_in, H, W)."""
    if upsample:
        # F.interpolate(scale_factor=2), default mode='nearest'.
        # TODO(synk): fold the nearest-upsample into the im2col slicing
        # (stride tricks on the original x) to avoid the materialized 4x copy.
        x = jnp.repeat(jnp.repeat(x, 2, axis=2), 2, axis=3)

    n, c_in, h, w_sp = x.shape
    c_out = w.shape[0]
    pad = kernel_size // 2
    if gamma is None:
        gamma = jnp.ones((c_out,), jnp.float32)
    if beta is None:
        beta = jnp.zeros((c_out,), jnp.float32)

    # ReflectionPad2d(kernel_size // 2).
    xpad = jnp.pad(x, ((0, 0), (0, 0), (pad, pad), (pad, pad)), mode="reflect")
    h_pad, w_pad = h + 2 * pad, w_sp + 2 * pad
    h_out = (h_pad - kernel_size) // stride + 1
    w_out = (w_pad - kernel_size) // stride + 1
    hw = h_out * w_out
    ckk = c_in * kernel_size * kernel_size

    # Wrapper-side im2col + flattened weights (one-time XLA layout work).
    # TODO(synk): fuse im2col into the kernel (halo row-strip DMA + K*K
    # accumulated dots) to cut the K^2 HBM read expansion (matters most on v5e).
    patches = _im2col(xpad, kernel_size, stride, h_out, w_out).astype(compute_dtype)
    w_flat = w.reshape(c_out, ckk).astype(compute_dtype)

    cd = jnp.dtype(compute_dtype).itemsize
    od = jnp.dtype(x.dtype).itemsize
    strip, num_strips, hw_pad, vmem_limit = _choose_strip_and_vmem(
        hw, ckk, c_out, cd, od, max_hw_strip)

    if hw_pad > hw:
        # Zero-padded columns contribute exactly 0 to sum / sum-of-squares
        # (no bias is added before the statistics), so the norm stays exact;
        # the padded lanes are cropped in the wrapper.
        patches = jnp.pad(patches, ((0, 0), (0, 0), (0, hw_pad - hw)))

    # Packed per-channel params: [bias, gamma, beta].  Bias is dropped (zeroed)
    # under normalize=True: a per-channel constant cancels exactly under the
    # full-sample mean subtraction.
    prm = jnp.stack(
        [jnp.zeros_like(b) if normalize else b, gamma, beta],
        axis=0).astype(jnp.float32).reshape(3, c_out, 1)

    # --- BlockSpecs (leading batch dim squeezed -> 2-D refs in the kernel) ---
    patch_block = (pl.Squeezed(), ckk, strip)
    patch_idx = lambda i, si: (i, 0, si)
    if num_strips >= 3:
        try:
            patches_spec = pl.BlockSpec(patch_block, patch_idx,
                                        pipeline_mode=pl.Buffered(3))
        except TypeError:  # older jax without pipeline_mode
            patches_spec = pl.BlockSpec(patch_block, patch_idx)
    else:
        patches_spec = pl.BlockSpec(patch_block, patch_idx)

    w_spec = pl.BlockSpec((c_out, ckk), lambda i, si: (0, 0))
    prm_spec = pl.BlockSpec((3, c_out, 1), lambda i, si: (0, 0, 0))
    y_spec = pl.BlockSpec((pl.Squeezed(), c_out, strip), lambda i, si: (i, 0, si))
    ss_spec = pl.BlockSpec((pl.Squeezed(), 2, c_out, 1), lambda i, si: (i, 0, 0, 0))

    if normalize:
        fused = (num_strips == 1)
        kern = functools.partial(_conv_norm_kernel, relu=relu,
                                 inv_hw=1.0 / float(hw), fused=fused)
        # Pass 1: conv strips + accumulated statistics (strip axis arbitrary).
        # TODO(synk): for N==1 on v7x, split the strip axis per core with
        # partial stats + a cross-core combine to use both TensorCores here too.
        y_flat, ss = pl.pallas_call(
            kern,
            out_shape=(jax.ShapeDtypeStruct((n, c_out, hw_pad), x.dtype),
                       jax.ShapeDtypeStruct((n, 2, c_out, 1), jnp.float32)),
            grid_spec=pltpu.PrefetchScalarGridSpec(
                num_scalar_prefetch=0,
                grid=(n, num_strips),
                in_specs=[patches_spec, w_spec, prm_spec],
                out_specs=[y_spec, ss_spec],
                scratch_shapes=[pltpu.VMEM((c_out, 1), jnp.float32),
                                pltpu.VMEM((c_out, 1), jnp.float32)]),
            compiler_params=pltpu.CompilerParams(
                dimension_semantics=("parallel", "arbitrary"),
                vmem_limit_bytes=vmem_limit),
        )(patches, w_flat, prm)

        if fused:
            out_flat = y_flat
        else:
            # Pass 2: apply scale/shift (+ReLU).  Strips are independent here,
            # so both grid axes are parallel; output is aliased in place.
            out_flat = pl.pallas_call(
                functools.partial(_apply_norm_kernel, relu=relu),
                out_shape=jax.ShapeDtypeStruct((n, c_out, hw_pad), x.dtype),
                grid_spec=pltpu.PrefetchScalarGridSpec(
                    num_scalar_prefetch=0,
                    grid=(n, num_strips),
                    in_specs=[y_spec, ss_spec],
                    out_specs=y_spec),
                input_output_aliases={0: 0},
                compiler_params=pltpu.CompilerParams(
                    dimension_semantics=("parallel", "parallel"),
                    vmem_limit_bytes=vmem_limit),
            )(y_flat, ss)
    else:
        out_flat = pl.pallas_call(
            functools.partial(_conv_bias_kernel, relu=relu),
            out_shape=jax.ShapeDtypeStruct((n, c_out, hw_pad), x.dtype),
            grid_spec=pltpu.PrefetchScalarGridSpec(
                num_scalar_prefetch=0,
                grid=(n, num_strips),
                in_specs=[patches_spec, w_spec, prm_spec],
                out_specs=y_spec),
            compiler_params=pltpu.CompilerParams(
                dimension_semantics=("parallel", "parallel"),
                vmem_limit_bytes=vmem_limit),
        )(patches, w_flat, prm)

    return out_flat[:, :, :hw].reshape(n, c_out, h_out, w_out)


# ---------------------------------------------------------------------------
# Pure-JAX reference matching the PyTorch forward
# ---------------------------------------------------------------------------

def _reference(x, w, b, gamma, beta, *, kernel_size, stride=1, upsample=False,
               normalize=True, relu=True):
    if upsample:
        x = jnp.repeat(jnp.repeat(x, 2, axis=2), 2, axis=3)
    pad = kernel_size // 2
    xpad = jnp.pad(x, ((0, 0), (0, 0), (pad, pad), (pad, pad)), mode="reflect")
    y = lax.conv_general_dilated(
        xpad, w, window_strides=(stride, stride), padding="VALID",
        dimension_numbers=("NCHW", "OIHW", "NCHW"))
    y = y + b[None, :, None, None]
    if normalize:
        mean = jnp.mean(y, axis=(2, 3), keepdims=True)
        var = jnp.mean((y - mean) ** 2, axis=(2, 3), keepdims=True)
        y = (y - mean) / jnp.sqrt(var + 1e-5)
        y = y * gamma[None, :, None, None] + beta[None, :, None, None]
    if relu:
        y = jnp.maximum(y, 0.0)
    return y


if __name__ == "__main__":
    N, C_IN, H, W = 2, 4, 16, 16
    C_OUT, K = 8, 3

    key = jax.random.PRNGKey(0)
    k1, k2, k3, k4, k5 = jax.random.split(key, 5)

    x = jax.random.normal(k1, (N, C_IN, H, W), jnp.float32)
    fan_in = C_IN * K * K
    w = jax.random.normal(k2, (C_OUT, C_IN, K, K), jnp.float32) / jnp.sqrt(fan_in)
    b = 0.1 * jax.random.normal(k3, (C_OUT,), jnp.float32)
    gamma = 1.0 + 0.1 * jax.random.normal(k4, (C_OUT,), jnp.float32)
    beta = 0.1 * jax.random.normal(k5, (C_OUT,), jnp.float32)

    def run(cfg, **kw):
        fn = jax.jit(functools.partial(conv_block, **cfg, **kw))
        return jax.block_until_ready(fn(x, w, b, gamma, beta))

    # 1) Standard block (norm + relu), f32, whole image fits one strip -> fused path.
    cfg1 = dict(kernel_size=K, stride=1, upsample=False, normalize=True, relu=True)
    out1 = run(cfg1, compute_dtype=jnp.float32)
    ref1 = _reference(x, w, b, gamma, beta, **cfg1)
    assert out1.shape == ref1.shape == (N, C_OUT, H, W), (out1.shape, ref1.shape)
    err1 = float(jnp.max(jnp.abs(out1 - ref1)))
    assert jnp.allclose(out1, ref1, atol=1e-4, rtol=1e-4), err1

    # 2) Upsample + norm with forced 128-lane strips: exercises the multi-strip
    #    two-pass norm (accumulated stats + apply pass) and Buffered(3) patches.
    cfg2 = dict(kernel_size=K, stride=1, upsample=True, normalize=True, relu=True)
    out2 = run(cfg2, compute_dtype=jnp.float32, max_hw_strip=128)
    ref2 = _reference(x, w, b, gamma, beta, **cfg2)
    assert out2.shape == ref2.shape, (out2.shape, ref2.shape)
    err2 = float(jnp.max(jnp.abs(out2 - ref2)))
    assert jnp.allclose(out2, ref2, atol=1e-4, rtol=1e-4), err2

    # 3) Upsample + stride 2, no norm (bias path), forced strips.
    cfg3 = dict(kernel_size=K, stride=2, upsample=True, normalize=False, relu=True)
    out3 = run(cfg3, compute_dtype=jnp.float32, max_hw_strip=128)
    ref3 = _reference(x, w, b, gamma, beta, **cfg3)
    assert out3.shape == ref3.shape, (out3.shape, ref3.shape)
    err3 = float(jnp.max(jnp.abs(out3 - ref3)))
    assert jnp.allclose(out3, ref3, atol=1e-4, rtol=1e-4), err3

    # 4) Default bf16 compute path (full MXU rate / half patch DMA); loose tol.
    out4 = run(cfg1)   # compute_dtype defaults to bfloat16
    err4 = float(jnp.max(jnp.abs(out4 - ref1)))
    assert jnp.allclose(out4, ref1, atol=1e-1, rtol=1e-1), err4

    print("KERNEL_OK")
</pallas_src>

<mosaic_0001>
module attributes {stable_mosaic.version = 11 : i64} {
  func.func @_conv_norm_kernel(%arg0: i32, %arg1: i32, %arg2: memref<1x36x256xf32, #tpu.memory_space<vmem>>, %arg3: memref<8x36xf32, #tpu.memory_space<vmem>>, %arg4: memref<3x8x1xf32, #tpu.memory_space<vmem>>, %arg5: memref<1x8x256xf32, #tpu.memory_space<vmem>>, %arg6: memref<1x2x8x1xf32, #tpu.memory_space<vmem>>, %arg7: memref<8x1xf32, #tpu.memory_space<vmem>>, %arg8: memref<8x1xf32, #tpu.memory_space<vmem>>) attributes {dimension_semantics = [#tpu.dimension_semantics<parallel>, #tpu.dimension_semantics<arbitrary>], iteration_bounds = array<i64: 2, 1>, scalar_prefetch = 0 : i64, scratch_operands = 2 : i64, tpu.core_type = #tpu.core_type<tc>, window_params = [{transform_indices = @transform_0, window_bounds = array<i64: 1, 36, 256>}, {pipeline_mode = #tpu.pipeline_mode<synchronous>, transform_indices = @transform_1, window_bounds = array<i64: 8, 36>}, {pipeline_mode = #tpu.pipeline_mode<synchronous>, transform_indices = @transform_2, window_bounds = array<i64: 3, 8, 1>}, {transform_indices = @transform_3, window_bounds = array<i64: 1, 8, 256>}, {transform_indices = @transform_4, window_bounds = array<i64: 1, 2, 8, 1>}]} {
    %c0 = arith.constant 0 : index
    %c0_0 = arith.constant 0 : index
    %0 = vector.load %arg3[%c0, %c0_0] : memref<8x36xf32, #tpu.memory_space<vmem>>, vector<8x36xf32>
    %c0_1 = arith.constant 0 : index
    %c0_2 = arith.constant 0 : index
    %c0_3 = arith.constant 0 : index
    %1 = vector.load %arg2[%c0_1, %c0_2, %c0_3] : memref<1x36x256xf32, #tpu.memory_space<vmem>>, vector<1x36x256xf32>
    %2 = vector.shape_cast %1 : vector<1x36x256xf32> to vector<36x256xf32>
    %cst = arith.constant dense<0.000000e+00> : vector<8x256xf32>
    %3 = tpu.matmul %0, %2, %cst {dimension_numbers = #tpu.dot_dimension_numbers<[1], [0], [0], [1], [0, 0, 1, 1], [], []>} : vector<8x36xf32>, vector<36x256xf32>, vector<8x256xf32> -> vector<8x256xf32>
    %cst_4 = arith.constant dense<0.000000e+00> : vector<8xf32>
    %4 = vector.multi_reduction <add>, %3, %cst_4 [1] : vector<8x256xf32> to vector<8xf32>
    %5 = vector.shape_cast %4 : vector<8xf32> to vector<8x1xf32>
    %cst_5 = arith.constant 3.906250e-03 : f32
    %6 = vector.broadcast %cst_5 : f32 to vector<8x1xf32>
    %7 = arith.mulf %5, %6 : vector<8x1xf32>
    %8 = arith.mulf %3, %3 : vector<8x256xf32>
    %cst_6 = arith.constant dense<0.000000e+00> : vector<8xf32>
    %9 = vector.multi_reduction <add>, %8, %cst_6 [1] : vector<8x256xf32> to vector<8xf32>
    %10 = vector.shape_cast %9 : vector<8xf32> to vector<8x1xf32>
    %cst_7 = arith.constant 3.906250e-03 : f32
    %11 = vector.broadcast %cst_7 : f32 to vector<8x1xf32>
    %12 = arith.mulf %10, %11 : vector<8x1xf32>
    %13 = arith.mulf %7, %7 : vector<8x1xf32>
    %14 = arith.subf %12, %13 : vector<8x1xf32>
    %c1 = arith.constant 1 : index
    %c0_8 = arith.constant 0 : index
    %c0_9 = arith.constant 0 : index
    %15 = vector.load %arg4[%c1, %c0_8, %c0_9] : memref<3x8x1xf32, #tpu.memory_space<vmem>>, vector<1x8x1xf32>
    %16 = vector.shape_cast %15 : vector<1x8x1xf32> to vector<8x1xf32>
    %cst_10 = arith.constant 9.99999974E-6 : f32
    %17 = vector.broadcast %cst_10 : f32 to vector<8x1xf32>
    %18 = arith.addf %14, %17 : vector<8x1xf32>
    %19 = math.rsqrt %18 : vector<8x1xf32>
    %20 = arith.mulf %16, %19 : vector<8x1xf32>
    %c2 = arith.constant 2 : index
    %c0_11 = arith.constant 0 : index
    %c0_12 = arith.constant 0 : index
    %21 = vector.load %arg4[%c2, %c0_11, %c0_12] : memref<3x8x1xf32, #tpu.memory_space<vmem>>, vector<1x8x1xf32>
    %22 = vector.shape_cast %21 : vector<1x8x1xf32> to vector<8x1xf32>
    %23 = arith.mulf %7, %20 : vector<8x1xf32>
    %24 = arith.subf %22, %23 : vector<8x1xf32>
    %25 = vector.broadcast %20 : vector<8x1xf32> to vector<8x256xf32>
    %26 = arith.mulf %3, %25 : vector<8x256xf32>
    %27 = vector.broadcast %24 : vector<8x1xf32> to vector<8x256xf32>
    %28 = arith.addf %26, %27 : vector<8x256xf32>
    %cst_13 = arith.constant 0.000000e+00 : f32
    %29 = vector.broadcast %cst_13 : f32 to vector<8x256xf32>
    %30 = arith.maximumf %28, %29 : vector<8x256xf32>
    %c0_14 = arith.constant 0 : index
    %c0_15 = arith.constant 0 : index
    %c0_16 = arith.constant 0 : index
    %31 = vector.load %arg5[%c0_14, %c0_15, %c0_16] : memref<1x8x256xf32, #tpu.memory_space<vmem>>, vector<1x8x256xf32>
    %32 = vector.shape_cast %31 : vector<1x8x256xf32> to vector<8x256xf32>
    %33 = vector.shape_cast %30 : vector<8x256xf32> to vector<1x8x256xf32>
    tpu.vector_store %arg5[%c0_14, %c0_15, %c0_16], %33 {strides = array<i32>} : memref<1x8x256xf32, #tpu.memory_space<vmem>>, vector<1x8x256xf32>,
    %c0_17 = arith.constant 0 : index
    %c0_18 = arith.constant 0 : index
    %c0_19 = arith.constant 0 : index
    %c0_20 = arith.constant 0 : index
    %34 = vector.load %arg6[%c0_17, %c0_18, %c0_19, %c0_20] : memref<1x2x8x1xf32, #tpu.memory_space<vmem>>, vector<1x1x8x1xf32>
    %35 = vector.shape_cast %34 : vector<1x1x8x1xf32> to vector<8x1xf32>
    %36 = vector.shape_cast %20 : vector<8x1xf32> to vector<1x1x8x1xf32>
    tpu.vector_store %arg6[%c0_17, %c0_18, %c0_19, %c0_20], %36 {strides = array<i32>} : memref<1x2x8x1xf32, #tpu.memory_space<vmem>>, vector<1x1x8x1xf32>,
    %c0_21 = arith.constant 0 : index
    %c1_22 = arith.constant 1 : index
    %c0_23 = arith.constant 0 : index
    %c0_24 = arith.constant 0 : index
    %37 = vector.load %arg6[%c0_21, %c1_22, %c0_23, %c0_24] : memref<1x2x8x1xf32, #tpu.memory_space<vmem>>, vector<1x1x8x1xf32>
    %38 = vector.shape_cast %37 : vector<1x1x8x1xf32> to vector<8x1xf32>
    %39 = vector.shape_cast %24 : vector<8x1xf32> to vector<1x1x8x1xf32>
    tpu.vector_store %arg6[%c0_21, %c1_22, %c0_23, %c0_24], %39 {strides = array<i32>} : memref<1x2x8x1xf32, #tpu.memory_space<vmem>>, vector<1x1x8x1xf32>,
    return
  }
  func.func @transform_0(%arg0: i32, %arg1: i32) -> (i32, i32, i32) {
    %c0_i32 = arith.constant 0 : i32
    %c0_i32_0 = arith.constant 0 : i32
    return %arg0, %c0_i32, %arg1 : i32, i32, i32
  }
  func.func @transform_1(%arg0: i32, %arg1: i32) -> (i32, i32) {
    %c0_i32 = arith.constant 0 : i32
    %c0_i32_0 = arith.constant 0 : i32
    %c0_i32_1 = arith.constant 0 : i32
    return %c0_i32, %c0_i32_0 : i32, i32
  }
  func.func @transform_2(%arg0: i32, %arg1: i32) -> (i32, i32, i32) {
    %c0_i32 = arith.constant 0 : i32
    %c0_i32_0 = arith.constant 0 : i32
    %c0_i32_1 = arith.constant 0 : i32
    %c0_i32_2 = arith.constant 0 : i32
    return %c0_i32, %c0_i32_0, %c0_i32_1 : i32, i32, i32
  }
  func.func @transform_3(%arg0: i32, %arg1: i32) -> (i32, i32, i32) {
    %c0_i32 = arith.constant 0 : i32
    %c0_i32_0 = arith.constant 0 : i32
    return %arg0, %c0_i32, %arg1 : i32, i32, i32
  }
  func.func @transform_4(%arg0: i32, %arg1: i32) -> (i32, i32, i32, i32) {
    %c0_i32 = arith.constant 0 : i32
    %c0_i32_0 = arith.constant 0 : i32
    %c0_i32_1 = arith.constant 0 : i32
    %c0_i32_2 = arith.constant 0 : i32
    return %arg0, %c0_i32, %c0_i32_0, %c0_i32_1 : i32, i32, i32, i32
  }
}

</mosaic_0001>

<llo_original>
// kernel: conv_block.1
$region0: #{conv_block.1}
  #allocation0 [shape = 'u32[]', space=smem, size = 0x4, offset = 0x4, fixed_abs, tag = 'smem constant byte address 0x4 - core index']
  #allocation1 [shape = 'u32[144,128]{1,0:T(1,128)}', space=vmem, size = 0x12000, scoped, tag = 'internal scratch']
  #allocation2 [shape = 'f32[8,1]{1,0:T(8,128)}', space=vmem, size = 0x1000, scoped, tag = 'scratch operand']
  #allocation3 [shape = 'f32[8,1]{1,0:T(8,128)}', space=vmem, size = 0x1000, scoped, tag = 'scratch operand']
  %s0 = inlined_call_operand.vmem [shape: f32[2,36,256], index: 0, kind: input, shape index: {}]
  %s1 = inlined_call_operand.vmem [shape: f32[8,36], index: 1, kind: input, shape index: {}]
  %s2 = inlined_call_operand.vmem [shape: f32[3,8,1], index: 2, kind: input, shape index: {}]
  %s3 = inlined_call_operand.vmem [shape: f32[2,8,256], index: 3, kind: output, shape index: {0}]
  %s4 = inlined_call_operand.hbm [shape: f32[2,2,8,1], index: 4, kind: output, shape index: {1}]
  %5 = xla_tuple %s3, %s4
  %s6 = sld [smem:[#allocation0]]
  $region53: #{conv_block.1} parent=0
    _
  %s8 = ssub.s32 1, %s6
  %s9 = scalar_select 0, %s8, %s6
  $region1: #{conv_block.1} parent=0
    #allocation4 [shape = 'u8[16384]{0}', space=vmem, size = 0x4000, scoped, tag = 'output window, operand 1']
    #allocation5 [shape = 's32[2]{0}', space=sflag, size = 0x8, scoped, tag = 'scoped memory for conv_block.1']
    %10 = vsyncpa [#allocation5], 0
    %s11 = scalar_lea.sflag [#allocation5], 1
    %12 = vsyncpa %s11, 0
    loop: start=0, step=1, limit=4
    $region2: #{conv_block.1} parent=1 // loop_pre_header
      _
    $region3: #{conv_block.1} parent=1 // loop_header
      %s14 = sphi 0, %s18
      %p15 = scmp.ge.s32.totalorder %s14, 4
      %s21 = sphi 0, %s33
      %s22 = sphi 0, %s29
      %s23 = sphi 0, %s21
      %s24 = sphi 0, %s22
      %s25 = sphi 0, %s23
      %s26 = sphi 0, %s24
      %s38 = sphi 0, %s40
      %s41 = sphi 0, %s38
      %s42 = sphi 0, %s41
      %s58 = sphi 0, %s42
      %s62 = sphi 0, %s62
      %s64 = sphi 0, %s62
      %s65 = sphi 0, %s64
      %s79 = sphi 0, %s65
      %s83 = sphi 0, %s83
      %s85 = sphi 0, %s83
      %s86 = sphi 0, %s85
      %s100 = sphi 0, %s86
      %s108 = sphi 0, %s110
      %s111 = sphi 0, %s108
      %s112 = sphi 0, %s111
      %s128 = sphi 0, %s112
      %s134 = sphi 0, %s136
      %s137 = sphi 0, %s134
      %s138 = sphi 0, %s137
      %s154 = sphi 0, %s138
    $region4: #{conv_block.1} parent=1 // loop_header_branch
      %17 = sbr.rel (%p15) target = $region8
    $region5: #{conv_block.1} parent=1 // loop_body
      %s19 = ssub.s32 %s14, 1
      %s20 = ssub.s32 %s14, 2
      %s27 = sadd.s32 1, %s22
      %p28 = scmp.ge.s32.totalorder %s27, 1
      %s29 = scalar_select %p28, 0, %s27
      %s30 = sadd.s32 1, %s21
      %s31 = scalar_select %p28, %s30, %s21
      %p32 = scmp.ge.s32.totalorder %s31, 2
      %s33 = scalar_select %p32, 0, %s31
      %s34 = ssub.s32 %s21, %s33
      %s35 = ssub.s32 %s22, %s29
      %s36 = sor.u32 %s34, %s35
      %p37 = scmp.eq.s32.totalorder %s36, 0
      %s39 = sadd.s32 %s38, 1
      %s40 = scalar_select %p37, %s38, %s39
      %p43 = pneg %p37
      %p44 = scmp.eq.s32.totalorder %s14, 1
      %p45 = por %p43, %p44
      %p46 = scmp.ne.s32.totalorder %s38, %s41
      %p47 = scmp.eq.s32.totalorder %s14, 0
      %p48 = por %p46, %p47
      %p49 = scmp.ne.s32.totalorder %s38, %s41
      %p50 = scmp.eq.s32.totalorder %s19, 1
      %p51 = por %p49, %p50
      %p52 = scmp.ne.s32.totalorder %s41, %s42
      %p53 = scmp.eq.s32.totalorder %s19, 0
      %p54 = por %p52, %p53
      %p55 = scmp.ne.s32.totalorder %s41, %s42
      %p56 = scmp.eq.s32.totalorder %s20, 1
      %p57 = por %p55, %p56
      %p59 = scmp.ne.s32.totalorder %s42, %s58
      %p60 = scmp.eq.s32.totalorder %s20, 0
      %p61 = por %p59, %p60
      %s63 = sadd.s32 %s62, 1
      %p66 = scmp.eq.s32.totalorder %s14, 1
      %p67 = scmp.ne.s32.totalorder %s62, %s64
      %p68 = scmp.eq.s32.totalorder %s14, 0
      %p69 = por %p67, %p68
      %p70 = scmp.ne.s32.totalorder %s62, %s64
      %p71 = scmp.eq.s32.totalorder %s19, 1
      %p72 = por %p70, %p71
      %p73 = scmp.ne.s32.totalorder %s64, %s65
      %p74 = scmp.eq.s32.totalorder %s19, 0
      %p75 = por %p73, %p74
      %p76 = scmp.ne.s32.totalorder %s64, %s65
      %p77 = scmp.eq.s32.totalorder %s20, 1
      %p78 = por %p76, %p77
      %p80 = scmp.ne.s32.totalorder %s65, %s79
      %p81 = scmp.eq.s32.totalorder %s20, 0
      %p82 = por %p80, %p81
      %s84 = sadd.s32 %s83, 1
      %p87 = scmp.eq.s32.totalorder %s14, 1
      %p88 = scmp.ne.s32.totalorder %s83, %s85
      %p89 = scmp.eq.s32.totalorder %s14, 0
      %p90 = por %p88, %p89
      %p91 = scmp.ne.s32.totalorder %s83, %s85
      %p92 = scmp.eq.s32.totalorder %s19, 1
      %p93 = por %p91, %p92
      %p94 = scmp.ne.s32.totalorder %s85, %s86
      %p95 = scmp.eq.s32.totalorder %s19, 0
      %p96 = por %p94, %p95
      %p97 = scmp.ne.s32.totalorder %s85, %s86
      %p98 = scmp.eq.s32.totalorder %s20, 1
      %p99 = por %p97, %p98
      %p101 = scmp.ne.s32.totalorder %s86, %s100
      %p102 = scmp.eq.s32.totalorder %s20, 0
      %p103 = por %p101, %p102
      %s104 = ssub.s32 %s21, %s33
      %s105 = ssub.s32 %s22, %s29
      %s106 = sor.u32 %s104, %s105
      %p107 = scmp.eq.s32.totalorder %s106, 0
      %s109 = sadd.s32 %s108, 1
      %s110 = scalar_select %p107, %s108, %s109
      %p113 = pneg %p107
      %p114 = scmp.eq.s32.totalorder %s14, 1
      %p115 = por %p113, %p114
      %p116 = scmp.ne.s32.totalorder %s108, %s111
      %p117 = scmp.eq.s32.totalorder %s14, 0
      %p118 = por %p116, %p117
      %p119 = scmp.ne.s32.totalorder %s108, %s111
      %p120 = scmp.eq.s32.totalorder %s19, 1
      %p121 = por %p119, %p120
      %p122 = scmp.ne.s32.totalorder %s111, %s112
      %p123 = scmp.eq.s32.totalorder %s19, 0
      %p124 = por %p122, %p123
      %p125 = scmp.ne.s32.totalorder %s111, %s112
      %p126 = scmp.eq.s32.totalorder %s20, 1
      %p127 = por %p125, %p126
      %p129 = scmp.ne.s32.totalorder %s112, %s128
      %p130 = scmp.eq.s32.totalorder %s20, 0
      %p131 = por %p129, %p130
      %s132 = ssub.s32 %s21, %s33
      %p133 = scmp.eq.s32.totalorder %s132, 0
      %s135 = sadd.s32 %s134, 1
      %s136 = scalar_select %p133, %s134, %s135
      %p139 = pneg %p133
      %p140 = scmp.eq.s32.totalorder %s14, 1
      %p141 = por %p139, %p140
      %p142 = scmp.ne.s32.totalorder %s134, %s137
      %p143 = scmp.eq.s32.totalorder %s14, 0
      %p144 = por %p142, %p143
      %p145 = scmp.ne.s32.totalorder %s134, %s137
      %p146 = scmp.eq.s32.totalorder %s19, 1
      %p147 = por %p145, %p146
      %p148 = scmp.ne.s32.totalorder %s137, %s138
      %p149 = scmp.eq.s32.totalorder %s19, 0
      %p150 = por %p148, %p149
      %p151 = scmp.ne.s32.totalorder %s137, %s138
      %p152 = scmp.eq.s32.totalorder %s20, 1
      %p153 = por %p151, %p152
      %p155 = scmp.ne.s32.totalorder %s138, %s154
      %p156 = scmp.eq.s32.totalorder %s20, 0
      %p157 = por %p155, %p156
      %p158 = scmp.le.s32.totalorder 1, %s14
      %p159 = scmp.lt.s32.totalorder %s14, 3
      %p160 = pnand %p158, %p159
      %p161 = pneg %p160
      // Predicated region
      $region9: #{conv_block.1} parent=5 // pred_check
        _
      $region10: #{conv_block.1} parent=5 // pred_check_branch
        %163 = sbr.rel (%p160) target = $region12
      $region11: #{conv_block.1} parent=5 // pred_region
        %s164 = ssub.s32 %s14, 1
        // Predicated region
        $region13: #{conv_block.1} parent=11 // pred_check
          %p165 = pneg %p75
        $region14: #{conv_block.1} parent=11 // pred_check_branch
          %167 = sbr.rel (%p165) target = $region16
        $region15: #{conv_block.1} parent=11 // pred_region
          _
        $region16: #{conv_block.1} parent=11 // pred_fallthru
          _
        // Predicated region
        $region17: #{conv_block.1} parent=11 // pred_check
          %p168 = pneg %p96
        $region18: #{conv_block.1} parent=11 // pred_check_branch
          %170 = sbr.rel (%p168) target = $region20
        $region19: #{conv_block.1} parent=11 // pred_region
          _
        $region20: #{conv_block.1} parent=11 // pred_fallthru
          _
      $region12: #{conv_block.1} parent=5 // pred_fallthru
        _
      %p171 = scmp.lt.s32.totalorder %s14, 2
      // Predicated region
      $region21: #{conv_block.1} parent=5 // pred_check
        %p172 = pneg %p171
      $region22: #{conv_block.1} parent=5 // pred_check_branch
        %174 = sbr.rel (%p172) target = $region24
      $region23: #{conv_block.1} parent=5 // pred_region
        // Predicated region
        $region25: #{conv_block.1} parent=23 // pred_check
          %p175 = pneg %p48
        $region26: #{conv_block.1} parent=23 // pred_check_branch
          %177 = sbr.rel (%p175) target = $region28
        $region27: #{conv_block.1} parent=23 // pred_region
          %s178 = smul.u32 2, %s22
          %p179 = scmp.lt.s32.totalorder %s21, 1
          %s180 = scalar_select %p179, %s21, 1
          %p181 = scmp.lt.s32.totalorder %s178, 1
          %s182 = scalar_select %p181, %s178, 1
          %s183 = smul.addr %s180, 10
          %s184 = sadd.s32 %s182, %s183
          %s185 = smul.addr %s184, 8
          %s186 = scalar_lea.vmem %s0, %s185
          %s187 = smul.u32 2, %s22
        $region28: #{conv_block.1} parent=23 // pred_fallthru
          _
      $region24: #{conv_block.1} parent=5 // pred_fallthru
        _
      %p188 = scmp.le.s32.totalorder 1, %s14
      %p189 = scmp.lt.s32.totalorder %s14, 3
      %p190 = pnand %p188, %p189
      %p191 = pneg %p190
      // Predicated region
      $region29: #{conv_block.1} parent=5 // pred_check
        _
      $region30: #{conv_block.1} parent=5 // pred_check_branch
        %193 = sbr.rel (%p190) target = $region32
      $region31: #{conv_block.1} parent=5 // pred_region
        %s194 = ssub.s32 %s14, 1
        %s195 = smul.u32 2, %s24
        %p196 = scmp.lt.s32.totalorder %s23, 1
        %s197 = scalar_select %p196, %s23, 1
        %p198 = scmp.lt.s32.totalorder %s195, 1
        %s199 = scalar_select %p198, %s195, 1
        %s200 = smul.addr %s197, 10
        %s201 = sadd.s32 %s199, %s200
        %s202 = smul.addr %s201, 8
        %s203 = scalar_lea.vmem %s0, %s202
        %p204 = pneg %p54
        %p205 = pneg %p51
        %p206 = pneg %p75
        %p207 = pneg %p72
        %p208 = pneg %p96
        %p209 = pneg %p93
        %p210 = pneg %p124
        %p211 = pneg %p121
        %s212 = smul.u32 2, %s24
        %p213 = scmp.lt.s32.totalorder %s23, 1
        %s214 = scalar_select %p213, %s23, 1
        %p215 = scmp.lt.s32.totalorder %s212, 1
        %s216 = scalar_select %p215, %s212, 1
        %s217 = smul.addr %s214, 2
        %s218 = sadd.s32 %s216, %s217
        %s219 = smul.addr %s218, 8
        %s220 = scalar_lea.vmem %s3, %s219
        %p221 = pneg %p150
        %p222 = pneg %p147
        %s223 = sand.u32 %s137, 1
        %s224 = scalar_lea.sflag [#allocation5], %s223
        %s225 = sand.u32 %s137, 1
        %s226 = smul.addr %s225, 16
        %s227 = scalar_lea.vmem [#allocation4], %s226
        %s228 = smul.u32 2, %s24
        %p229 = scmp.lt.s32.totalorder %s23, 1
        %s230 = scalar_select %p229, %s23, 1
        %p231 = scmp.lt.s32.totalorder %s228, 1
        %s232 = scalar_select %p231, %s228, 1
        %s233 = smul.addr %s230, 10
        %s234 = sadd.s32 %s232, %s233
        %s235 = smul.addr %s234, 8
        %s236 = scalar_lea.vmem %s0, %s235
        %s237 = smul.u32 2, %s24
        %s238 = smul.u32 2, %s24
        %p239 = scmp.lt.s32.totalorder %s23, 1
        %s240 = scalar_select %p239, %s23, 1
        %p241 = scmp.lt.s32.totalorder %s238, 1
        %s242 = scalar_select %p241, %s238, 1
        %s243 = smul.addr %s240, 2
        %s244 = sadd.s32 %s242, %s243
        %s245 = smul.addr %s244, 8
        %s246 = scalar_lea.vmem %s3, %s245
        %s247 = smul.u32 2, %s24
        %v248 = vld [vmem:[%s1] sm:$0xff]
        %v249 = vld [vmem:[%s236] sm:$0xff]
        %v250 = vld [vmem:[%s236 + $0x8] sm:$0xff]
        %v251 = vld [vmem:[%s236 + $0x10] sm:$0xff]
        %v252 = vld [vmem:[%s236 + $0x18] sm:$0xff]
        %v253 = vld [vmem:[%s236 + $0x20] sm:$0xff]
        %v254 = vld [vmem:[%s236 + $0x28] sm:$0xff]
        %v255 = vld [vmem:[%s236 + $0x30] sm:$0xff]
        %v256 = vld [vmem:[%s236 + $0x38] sm:$0xff]
        %v257 = vld [vmem:[%s236 + $0x40] sm:$0xf]
        %v258 = vld [vmem:[%s236 + $0x48] sm:$0xf]
        %vm259 = vcmask 293888
        %v261 = vsel %vm259, %v248, 0
        %vm263 = vcmask 1043456
        %v265 = vsel %vm263, %v257, 0
        %v268 = vsel %vm263, %v258, 0
        %270 = vmatprep.subr.mxu0 0.0
        %271 = vmatpush1.msra.mxu0 0.0
        %272 = vmatprep.subr.mxu0 0.0
        %273 = vmatpush1.msra.mxu0 0.0
        %274 = vmatprep.subr.mxu0 0.0
        %275 = vmatpush1.msra.mxu0 0.0
        %276 = vmatprep.subr.mxu0 0.0
        %277 = vmatpush1.msra.mxu0 0.0
        %278 = vmatprep.subr.mxu0 0.0
        %279 = vmatpush1.msra.mxu0 0.0
        %280 = vmatprep.subr.mxu0 0.0
        %281 = vmatpush1.msra.mxu0 0.0
        %282 = vmatprep.subr.mxu0 0.0
        %283 = vmatpush1.msra.mxu0 0.0
        %284 = vmatprep.subr.mxu0 0.0
        %285 = vmatpush1.msra.mxu0 0.0
        %286 = vmatprep.subr.mxu0 0.0
        %287 = vmatpush1.msra.mxu0 0.0
        %288 = vmatprep.subr.mxu0 0.0
        %289 = vmatpush1.msra.mxu0 0.0
        %290 = vmatprep.subr.mxu0 0.0
        %291 = vmatpush1.msra.mxu0 0.0
        %292 = vmatprep.subr.mxu0 %v268
        %293 = vmatpush1.msra.mxu0 %v265
        %294 = vmatprep.subr.mxu0 %v256
        %295 = vmatpush1.msra.mxu0 %v255
        %296 = vmatprep.subr.mxu0 %v254
        %297 = vmatpush1.msra.mxu0 %v253
        %298 = vmatprep.subr.mxu0 %v252
        %299 = vmatpush1.msra.mxu0 %v251
        %300 = vmatprep.subr.mxu0 %v250
        %301 = vmatpush1.msra.mxu0 %v249
        %302 = vmatprep.subr.mxu0 0.0
        %303 = vmatpush2.msra.mxu0 0.0
        %304 = vmatprep.subr.mxu0 0.0
        %305 = vmatpush2.msra.mxu0 0.0
        %306 = vmatprep.subr.mxu0 0.0
        %307 = vmatpush2.msra.mxu0 0.0
        %308 = vmatprep.subr.mxu0 0.0
        %309 = vmatpush2.msra.mxu0 0.0
        %310 = vmatprep.subr.mxu0 0.0
        %311 = vmatpush2.msra.mxu0 0.0
        %312 = vmatprep.subr.mxu0 0.0
        %313 = vmatpush2.msra.mxu0 0.0
        %314 = vmatprep.subr.mxu0 0.0
        %315 = vmatpush2.msra.mxu0 0.0
        %316 = vmatprep.subr.mxu0 0.0
        %317 = vmatpush2.msra.mxu0 0.0
        %318 = vmatprep.subr.mxu0 0.0
        %319 = vmatpush2.msra.mxu0 0.0
        %320 = vmatprep.subr.mxu0 0.0
        %321 = vmatpush2.msra.mxu0 0.0
        %322 = vmatprep.subr.mxu0 0.0
        %323 = vmatpush2.msra.mxu0 0.0
        %324 = vmatprep.subr.mxu0 0.0
        %325 = vmatpush2.msra.mxu0 0.0
        %326 = vmatprep.subr.mxu0 0.0
        %327 = vmatpush2.msra.mxu0 0.0
        %328 = vmatprep.subr.mxu0 0.0
        %329 = vmatpush2.msra.mxu0 0.0
        %330 = vmatprep.subr.mxu0 0.0
        %331 = vmatpush2.msra.mxu0 0.0
        %332 = vmatprep.subr.mxu0 0.0
        %333 = vmatpush2.msra.mxu0 0.0
        %334 = vmatprep.mubr.f32.mxu0 0.0
        %335 = vmatmul.mubr.f32.gmra.mxu0 %v261
        %v336 = vpop.f32.mrf.mxu0
        %v337 = vadd.f32 0.0, %v336
        %v338 = vpop.f32.mrf.mxu0
        %v339 = vadd.f32 0.0, %v338
        %340 = vdwg.mxu0
        %v341 = vadd.f32 %v337, %v339
        %342 = vadd.xlane.f32.xlu0 %v341
        %v343 = vpop.xlane.xlu0 %342
        %v344 = vmul.f32 %v343, 0.00390625
        %v345 = vmul.f32 %v337, %v337
        %v346 = vmul.f32 %v339, %v339
        %v347 = vadd.f32 %v345, %v346
        %348 = vadd.xlane.f32.xlu0 %v347
        %v349 = vpop.xlane.xlu0 %348
        %v350 = vmul.f32 %v349, 0.00390625
        %v351 = vmul.f32 %v344, %v344
        %v352 = vsub.f32 %v350, %v351
        %s353 = scalar_lea.vmem %s2, 8
        %v354 = vld [vmem:[%s353] sm:$0xff]
        %v355 = vadd.f32 %v352, 1e-05
        %v356 = vrsqrt.pop %v355
        %v357 = vmul.f32 %v354, %v356
        %s358 = scalar_lea.vmem %s2, 16
        %v359 = vld [vmem:[%s358] sm:$0xff]
        %v360 = vmul.f32 %v344, %v357
        %v361 = vsub.f32 %v359, %v360
        %363 = vset.pattern.permute.xlu0 0
        %364 = vperm.xlu0 %363, %v357
        %v365 = vpop.permute.xlu0 %364
        %v367 = vmul.f32 %v337, %v365
        %v368 = vmul.f32 %v339, %v365
        %370 = vset.pattern.permute.xlu0 0
        %371 = vperm.xlu0 %370, %v361
        %v372 = vpop.permute.xlu0 %371
        %v374 = vadd.f32 %v367, %v372
        %v375 = vadd.f32 %v368, %v372
        %v376 = vmax.f32 %v374, 0.0
        %v377 = vmax.f32 %v375, 0.0
        %378 = vst [vmem:[%s246] sm:$0xff] %v376
        %379 = vst [vmem:[%s246 + $0x8] sm:$0xff] %v377
        %vm380 = vcmask 7168
        %381 = vst.msk [vmem:[%s227] sm:$0xff] %vm380, %v357
        %s382 = scalar_lea.vmem %s227, 8 [#allocation4]
        %383 = vst.msk [vmem:[%s382] sm:$0xff] %vm380, %v361
        %s384 = smul.u32 2, %s24
        %p385 = scmp.lt.s32.totalorder %s23, 1
        %s386 = scalar_select %p385, %s23, 1
        %p387 = scmp.lt.s32.totalorder %s384, 1
        %s388 = scalar_select %p387, %s384, 1
        %s389 = smul.addr %s386, 2
        %s390 = sadd.s32 %s388, %s389
        %s391 = smul.addr %s390, 8
        %s392 = scalar_lea.vmem %s3, %s391
        %s393 = sand.u32 %s137, 1
        %s394 = scalar_lea.sflag [#allocation5], %s393
        %s395 = sand.u32 %s137, 1
        %s396 = smul.addr %s395, 16
        %s397 = scalar_lea.vmem [#allocation4], %s396
        // Predicated region
        $region33: #{conv_block.1} parent=31 // pred_check
          %p398 = pneg %p121
        $region34: #{conv_block.1} parent=31 // pred_check_branch
          %400 = sbr.rel (%p398) target = $region36
        $region35: #{conv_block.1} parent=31 // pred_region
          %s401 = smul.u32 2, %s24
        $region36: #{conv_block.1} parent=31 // pred_fallthru
          _
        // Predicated region
        $region37: #{conv_block.1} parent=31 // pred_check
          %p402 = pneg %p147
        $region38: #{conv_block.1} parent=31 // pred_check_branch
          %404 = sbr.rel (%p402) target = $region40
        $region39: #{conv_block.1} parent=31 // pred_region
          %s406 = ssub.s32 256, 256
          %407 = vsyncadd %s394, %s406
          %s408 = smul.addr %s23, 2
          %s409 = smul.addr %s408, 128
          %s410 = scalar_lea.hbm %s4, %s409
          %s411 = sshll.u32 %s397, 4
          %s412 = int_to_ptr.vmem [resolvable:$true] %s411
          %417 = dma.vmem_to_hbm [thread:$0]  %s412, 256, %s410, %s394, 128, 128, 8
        $region40: #{conv_block.1} parent=31 // pred_fallthru
          _
      $region32: #{conv_block.1} parent=5 // pred_fallthru
        _
      %p418 = scmp.le.s32.totalorder 2, %s14
      // Predicated region
      $region41: #{conv_block.1} parent=5 // pred_check
        %p419 = pneg %p418
      $region42: #{conv_block.1} parent=5 // pred_check_branch
        %421 = sbr.rel (%p419) target = $region44
      $region43: #{conv_block.1} parent=5 // pred_region
        %s422 = ssub.s32 %s14, 2
        // Predicated region
        $region45: #{conv_block.1} parent=43 // pred_check
          %p423 = pneg %p127
        $region46: #{conv_block.1} parent=43 // pred_check_branch
          %425 = sbr.rel (%p423) target = $region48
        $region47: #{conv_block.1} parent=43 // pred_region
          %s426 = smul.u32 2, %s26
          %p427 = scmp.lt.s32.totalorder %s25, 1
          %s428 = scalar_select %p427, %s25, 1
          %p429 = scmp.lt.s32.totalorder %s426, 1
          %s430 = scalar_select %p429, %s426, 1
          %s431 = smul.addr %s428, 2
          %s432 = sadd.s32 %s430, %s431
          %s433 = smul.addr %s432, 8
          %s434 = scalar_lea.vmem %s3, %s433
        $region48: #{conv_block.1} parent=43 // pred_fallthru
          _
        // Predicated region
        $region49: #{conv_block.1} parent=43 // pred_check
          %p435 = pneg %p153
        $region50: #{conv_block.1} parent=43 // pred_check_branch
          %437 = sbr.rel (%p435) target = $region52
        $region51: #{conv_block.1} parent=43 // pred_region
          %s438 = sand.u32 %s138, 1
          %s439 = scalar_lea.sflag [#allocation5], %s438
          %s440 = sand.u32 %s138, 1
          %s441 = smul.addr %s440, 16
          %s442 = scalar_lea.vmem [#allocation4], %s441
          %443 = dma.done %s439, 256
        $region52: #{conv_block.1} parent=43 // pred_fallthru
          _
      $region44: #{conv_block.1} parent=5 // pred_fallthru
        _
    $region6: #{conv_block.1} parent=1 // loop_footer
      %s18 = sadd.s32 1, %s14
    $region7: #{conv_block.1} parent=1 // loop_footer_branch
      %13 = sbr.rel target = $region3
    $region8: #{conv_block.1} parent=1 // loop_exit
      _
    %444 = vsyncpa [#allocation5], 1
    %s445 = scalar_lea.sflag [#allocation5], 1
    %446 = vsyncpa %s445, 1

</llo_original>
